<compile_context>
chip_gen: v5e
topology: v5e:2x2
jax: 0.10.0
libtpu: 0.0.40
codegen_flags: <defaults>
</compile_context>

<pallas_src>
import functools

import jax
import jax.numpy as jnp
from jax.experimental import pallas as pl
from jax.experimental.pallas import tpu as pltpu


def _round_up(x, m):
    return (x + m - 1) // m * m


def _vmem_capacity_bytes():
    """Per-TensorCore VMEM capacity; conservative fallback if unavailable."""
    try:
        cap = int(pltpu.get_tpu_info().vmem_capacity_bytes)
        if cap > 0:
            return cap
    except Exception:
        pass
    return 64 << 20  # v7x-safe fallback


# ---------------------------------------------------------------------------
# Fused path: whole layer stack in one pallas_call (small graphs).
# ---------------------------------------------------------------------------
def _gcn_fused_kernel(*refs, n_layers):
    a_ref, h_ref, norm_ref = refs[0], refs[1], refs[2]
    w_refs = refs[3:3 + n_layers]
    b_refs = refs[3 + n_layers:3 + 2 * n_layers]
    out_ref = refs[3 + 2 * n_layers]

    a = a_ref[...]                              # bf16 0/1, fed to the MXU as-is
    norm = norm_ref[...]                        # (N, 1) f32
    h = h_ref[...]                              # f32
    for l in range(n_layers):
        hw = jnp.dot(h, w_refs[l][...], preferred_element_type=jnp.float32)
        x = (hw * norm).astype(jnp.bfloat16)    # bf16 so A@X is bf16 x bf16 MXU
        h = jnp.dot(a, x, preferred_element_type=jnp.float32) * norm + b_refs[l][...]
        if l < n_layers - 1:
            h = jnp.maximum(h, 0.0)
    out_ref[...] = h.astype(out_ref.dtype)


def _fused_vmem_estimate(n_pad, f_in_pad, padded_params):
    total = n_pad * n_pad * 2                         # bf16 A (no f32 copy)
    total += n_pad * f_in_pad * 4 + n_pad * 128 * 4   # H0 + lane-padded norm
    for w_p, b_p in padded_params:
        fo = w_p.shape[1]
        total += (w_p.size + b_p.size) * 4
        total += n_pad * fo * (4 + 2 + 4)             # hw(f32) / x(bf16) / h(f32)
    return total


def _gcn_fused(a, h0, norm, padded_params, vmem_cap):
    n_pad = a.shape[0]
    f_in_pad = h0.shape[1]
    f_last_pad = padded_params[-1][0].shape[1]
    n_layers = len(padded_params)
    ws = [w for w, _ in padded_params]
    bs = [b for _, b in padded_params]

    est = _fused_vmem_estimate(n_pad, f_in_pad, padded_params)
    vmem_bytes = int(min(max(32 << 20, 2 * est), int(0.75 * vmem_cap)))

    flops = 0
    fi = f_in_pad
    for w, _ in padded_params:
        fo = w.shape[1]
        flops += 2 * n_pad * fi * fo + 2 * n_pad * n_pad * fo
        fi = fo
    bytes_accessed = int(a.size * 2 + h0.size * 4 + norm.size * 4
                         + sum(w.size * 4 + b.size * 4 for w, b in padded_params)
                         + n_pad * f_last_pad * 4)

    vmem_spec = pl.BlockSpec(memory_space=pltpu.MemorySpace.VMEM)
    return pl.pallas_call(
        functools.partial(_gcn_fused_kernel, n_layers=n_layers),
        out_shape=jax.ShapeDtypeStruct((n_pad, f_last_pad), jnp.float32),
        in_specs=[vmem_spec] * (3 + 2 * n_layers),
        out_specs=vmem_spec,
        compiler_params=pltpu.CompilerParams(vmem_limit_bytes=vmem_bytes),
        cost_estimate=pl.CostEstimate(flops=flops, transcendentals=0,
                                      bytes_accessed=bytes_accessed),
    )(a, h0, norm, *ws, *bs)


# ---------------------------------------------------------------------------
# Tiled path, pass 1: X = norm_src * (H @ W)   -> bf16 output (halves X stream)
# ---------------------------------------------------------------------------
def _transform_kernel(h_ref, w_ref, norm_ref, x_ref):
    hw = jnp.dot(h_ref[...], w_ref[...], preferred_element_type=jnp.float32)
    x_ref[...] = (hw * norm_ref[...]).astype(x_ref.dtype)


def _transform(h, w, norm, bm, vmem_cap):
    n_pad, f_in_pad = h.shape
    f_out_pad = w.shape[1]
    grid = (n_pad // bm,)
    vmem_bytes = int(2 * (bm * f_in_pad * 4 + f_in_pad * f_out_pad * 4
                          + bm * f_out_pad * 2 + bm * 128 * 4)) + (2 << 20)
    vmem_bytes = int(min(max(vmem_bytes, 8 << 20), int(0.75 * vmem_cap)))
    return pl.pallas_call(
        _transform_kernel,
        out_shape=jax.ShapeDtypeStruct((n_pad, f_out_pad), jnp.bfloat16),
        grid_spec=pltpu.PrefetchScalarGridSpec(
            num_scalar_prefetch=0,
            grid=grid,
            in_specs=[
                pl.BlockSpec((bm, f_in_pad), lambda i: (i, 0)),
                pl.BlockSpec((f_in_pad, f_out_pad), lambda i: (0, 0)),
                pl.BlockSpec((bm, 1), lambda i: (i, 0)),
            ],
            out_specs=pl.BlockSpec((bm, f_out_pad), lambda i: (i, 0)),
        ),
        compiler_params=pltpu.CompilerParams(
            dimension_semantics=("parallel",),
            vmem_limit_bytes=vmem_bytes),
        cost_estimate=pl.CostEstimate(
            flops=2 * n_pad * f_in_pad * f_out_pad,
            transcendentals=0,
            bytes_accessed=int(h.size * 4 + w.size * 4 + norm.size * 4
                               + n_pad * f_out_pad * 2)),
    )(h, w, norm)


# ---------------------------------------------------------------------------
# Tiled path, pass 2: out = relu?( norm_dst * (A @ X) + b )
#   grid = (row tiles [parallel], source-node tiles [arbitrary reduction])
#   A stays bf16, X is bf16 -> native bf16 x bf16 MXU dot, f32 accumulation
#   directly into the row-resident output block (no scratch accumulator).
# ---------------------------------------------------------------------------
def _aggregate_kernel(a_ref, x_ref, norm_ref, b_ref, out_ref, *,
                      apply_relu, bk, x_resident):
    k = pl.program_id(1)

    @pl.when(k == 0)
    def _init():
        out_ref[...] = jnp.zeros_like(out_ref)

    if x_resident:
        start = pl.multiple_of(k * bk, 128)
        x = x_ref[pl.ds(start, bk), :]
    else:
        x = x_ref[...]
    out_ref[...] += jnp.dot(a_ref[...], x, preferred_element_type=jnp.float32)

    @pl.when(k == pl.num_programs(1) - 1)
    def _finalize():
        out = out_ref[...] * norm_ref[...] + b_ref[...]
        if apply_relu:
            out = jnp.maximum(out, 0.0)
        out_ref[...] = out


def _aggregate(a, x, norm, b, bm, bk, *, apply_relu, vmem_cap, x_resident_budget):
    n_pad = a.shape[0]
    f_out_pad = x.shape[1]
    grid = (n_pad // bm, n_pad // bk)

    # Keep X fully VMEM-resident (read from HBM once) when it fits the budget.
    x_resident = (n_pad * f_out_pad * 2) <= x_resident_budget
    if x_resident:
        x_spec = pl.BlockSpec((n_pad, f_out_pad), lambda i, k: (0, 0))
        x_bytes = 2 * n_pad * f_out_pad * 2
    else:
        x_spec = pl.BlockSpec((bk, f_out_pad), lambda i, k: (k, 0))
        x_bytes = 2 * bk * f_out_pad * 2

    vmem_bytes = int(2 * bm * bk * 2 + x_bytes + 2 * bm * 128 * 4
                     + 2 * 8 * f_out_pad * 4 + 2 * bm * f_out_pad * 4) + (2 << 20)
    vmem_bytes = int(min(max(vmem_bytes, 8 << 20), int(0.75 * vmem_cap)))

    return pl.pallas_call(
        functools.partial(_aggregate_kernel, apply_relu=apply_relu,
                          bk=bk, x_resident=x_resident),
        out_shape=jax.ShapeDtypeStruct((n_pad, f_out_pad), jnp.float32),
        grid_spec=pltpu.PrefetchScalarGridSpec(
            num_scalar_prefetch=0,
            grid=grid,
            in_specs=[
                pl.BlockSpec((bm, bk), lambda i, k: (i, k)),   # A tile (bf16)
                x_spec,                                        # X (bf16)
                pl.BlockSpec((bm, 1), lambda i, k: (i, 0)),    # dest norm
                pl.BlockSpec((1, f_out_pad), lambda i, k: (0, 0)),  # bias
            ],
            out_specs=pl.BlockSpec((bm, f_out_pad), lambda i, k: (i, 0)),
        ),
        compiler_params=pltpu.CompilerParams(
            dimension_semantics=("parallel", "arbitrary"),
            vmem_limit_bytes=vmem_bytes),
        cost_estimate=pl.CostEstimate(
            flops=2 * n_pad * n_pad * f_out_pad,
            transcendentals=0,
            bytes_accessed=int(a.size * 2 + x.size * 2 + norm.size * 4
                               + b.size * 4 + n_pad * f_out_pad * 4)),
    )(a, x, norm, b)


# ---------------------------------------------------------------------------
# Padding / tiling selection: pad N only to multiples of 128 and pick tiles
# that divide n_pad (small search over extra 128-blocks to avoid a degenerate
# factorization that would explode the grid-step count).
# ---------------------------------------------------------------------------
def _largest_tile(n_pad, target):
    if n_pad <= target:
        return n_pad
    best = 128
    for t in range(256, target + 1, 128):
        if n_pad % t == 0:
            best = t
    return best


def _choose_padding(n, bm_target, bk_target):
    nb0 = -(-n // 128)
    best = None
    for extra in range(0, 5):
        n_pad = (nb0 + extra) * 128
        bm = _largest_tile(n_pad, bm_target)
        bk = _largest_tile(n_pad, bk_target)
        steps = (n_pad // bm) * (n_pad // bk)
        # cost: dominant A HBM bytes + per-grid-step overhead (~0.35us ~ 350KB)
        cost = 2 * n_pad * n_pad + steps * 350_000
        if best is None or cost < best[0]:
            best = (cost, n_pad, bm, bk)
    return best[1], best[2], best[3]


# ---------------------------------------------------------------------------
# Full forward
# ---------------------------------------------------------------------------
def gcn_forward(adj, features, params, *, block_m=512, block_k=1024,
                force_tiled=False, x_resident_budget=8 << 20):
    n, f_in = features.shape
    n_layers = len(params)
    n_classes = params[-1][0].shape[1]
    vmem_cap = _vmem_capacity_bytes()

    # ---- graph preprocessing (pure JAX, once; not the hot path) ----
    deg = jnp.sum(adj.astype(jnp.float32), axis=1)
    norm = jax.lax.rsqrt(jnp.maximum(deg, 1.0)).astype(jnp.float32)

    # ---- pad node axis (128-multiple) and feature axes (128 lanes) ----
    n_pad, bm, bk = _choose_padding(n, block_m, block_k)
    f_in_pad = _round_up(f_in, 128)

    a = jnp.zeros((n_pad, n_pad), jnp.bfloat16).at[:n, :n].set(adj.astype(jnp.bfloat16))
    h = jnp.zeros((n_pad, f_in_pad), jnp.float32).at[:n, :f_in].set(
        features.astype(jnp.float32))
    norm_p = jnp.zeros((n_pad, 1), jnp.float32).at[:n, 0].set(norm)

    padded_params = []
    fi = f_in_pad
    for (w, b) in params:
        fo = _round_up(w.shape[1], 128)
        w_p = jnp.zeros((fi, fo), jnp.float32).at[:w.shape[0], :w.shape[1]].set(w)
        b_p = jnp.zeros((1, fo), jnp.float32).at[0, :b.shape[0]].set(b)
        padded_params.append((w_p, b_p))
        fi = fo

    # Per-chip fused budget: ~50 MiB on v5e/v6e (128 MiB VMEM), ~25 MiB on v7x
    # (64 MiB VMEM) so medium graphs route to the 2-TC-friendly tiled path.
    fused_budget = min(50 << 20, int(0.40 * vmem_cap))
    use_fused = (not force_tiled) and (
        _fused_vmem_estimate(n_pad, f_in_pad, padded_params) <= fused_budget)

    if use_fused:
        out = _gcn_fused(a, h, norm_p, padded_params, vmem_cap)
    else:
        for i, (w_p, b_p) in enumerate(padded_params):
            x = _transform(h, w_p, norm_p, bm, vmem_cap)
            h = _aggregate(a, x, norm_p, b_p, bm, bk,
                           apply_relu=(i < n_layers - 1),
                           vmem_cap=vmem_cap,
                           x_resident_budget=x_resident_budget)
        out = h

    return out[:n, :n_classes]


# ---------------------------------------------------------------------------
# Deterministic inputs / parameters
# ---------------------------------------------------------------------------
def init_params(key, n_infeat, n_hidden, n_classes, n_layers):
    """Glorot-uniform weights + zero biases (matches GraphConv shapes)."""
    dims = [n_infeat] + [n_hidden] * n_layers + [n_classes]
    params = []
    for i in range(len(dims) - 1):
        key, sub = jax.random.split(key)
        fan_in, fan_out = dims[i], dims[i + 1]
        limit = jnp.sqrt(6.0 / (fan_in + fan_out))
        w = jax.random.uniform(sub, (fan_in, fan_out), jnp.float32, -limit, limit)
        b = jnp.zeros((fan_out,), jnp.float32)
        params.append((w, b))
    return params


def make_graph(key, n_nodes, avg_deg=8):
    """Deterministic synthetic undirected graph with self-loops (AddSelfLoop)."""
    p = avg_deg / n_nodes
    upper = (jax.random.uniform(key, (n_nodes, n_nodes)) < p).astype(jnp.float32)
    upper = jnp.triu(upper, k=1)
    adj = upper + upper.T
    adj = adj + jnp.eye(n_nodes, dtype=jnp.float32)
    return adj


def ref_forward(adj, h, params):
    """Pure-JAX f32 reference (same math, no Pallas, no bf16)."""
    deg = jnp.sum(adj, axis=1)
    norm = jax.lax.rsqrt(jnp.maximum(deg, 1.0))[:, None]
    for i, (w, b) in enumerate(params):
        h = norm * (adj @ (norm * (h @ w))) + b[None, :]
        if i < len(params) - 1:
            h = jnp.maximum(h, 0.0)
    return h


def ref_forward_quantized(adj, h, params):
    """Reference that mimics the kernels' bf16 quantization of X (tight check)."""
    deg = jnp.sum(adj, axis=1)
    norm = jax.lax.rsqrt(jnp.maximum(deg, 1.0))[:, None]
    a = adj.astype(jnp.bfloat16).astype(jnp.float32)
    for i, (w, b) in enumerate(params):
        x = (norm * (h @ w)).astype(jnp.bfloat16).astype(jnp.float32)
        h = norm * (a @ x) + b[None, :]
        if i < len(params) - 1:
            h = jnp.maximum(h, 0.0)
    return h


if __name__ == "__main__":
    root = jax.random.PRNGKey(0)
    k1g, k1f, k1p, k2g, k2f, k2p = jax.random.split(root, 6)

    # ---- test 1: toy sizes -> fused single-call path (and degenerate tiled) ----
    N_NODES, N_INFEAT, N_HIDDEN, N_CLASSES, N_LAYERS = 128, 64, 32, 8, 2
    adj1 = make_graph(k1g, N_NODES)
    feat1 = jax.random.normal(k1f, (N_NODES, N_INFEAT), jnp.float32)
    params1 = init_params(k1p, N_INFEAT, N_HIDDEN, N_CLASSES, N_LAYERS)

    out1_fused = gcn_forward(adj1, feat1, params1)
    out1_tiled = gcn_forward(adj1, feat1, params1, force_tiled=True)
    out1_fused, out1_tiled = jax.block_until_ready((out1_fused, out1_tiled))

    ref1_q = ref_forward_quantized(adj1, feat1, params1)
    ref1 = ref_forward(adj1, feat1, params1)
    assert out1_fused.shape == (N_NODES, N_CLASSES)
    assert jnp.allclose(out1_fused, ref1_q, atol=1e-2, rtol=1e-2), "fused mismatch"
    assert jnp.allclose(out1_tiled, ref1_q, atol=1e-2, rtol=1e-2), "tiled mismatch"
    assert jnp.allclose(out1_fused, ref1, atol=5e-2, rtol=5e-2), "fused vs f32 ref"

    # ---- test 2: larger graph -> multi-tile grid, k-reduction, padding, and
    #      both resident-X and streamed-X aggregation variants ----
    N2, F2, H2, C2, L2 = 256, 96, 64, 10, 2
    adj2 = make_graph(k2g, N2)
    feat2 = jax.random.normal(k2f, (N2, F2), jnp.float32)
    params2 = init_params(k2p, F2, H2, C2, L2)

    out2_fused = gcn_forward(adj2, feat2, params2)
    out2_tiled_res = gcn_forward(adj2, feat2, params2,
                                 block_m=128, block_k=128, force_tiled=True)
    out2_tiled_str = gcn_forward(adj2, feat2, params2,
                                 block_m=128, block_k=128, force_tiled=True,
                                 x_resident_budget=0)   # exercise streamed-X path
    out2_fused, out2_tiled_res, out2_tiled_str = jax.block_until_ready(
        (out2_fused, out2_tiled_res, out2_tiled_str))

    ref2_q = ref_forward_quantized(adj2, feat2, params2)
    ref2 = ref_forward(adj2, feat2, params2)
    assert out2_tiled_res.shape == (N2, C2)
    # Fused vs tiled: identical quantization points, only accumulation order differs.
    assert jnp.allclose(out2_tiled_res, out2_fused, atol=5e-3, rtol=5e-3), "tiled vs fused"
    assert jnp.allclose(out2_tiled_str, out2_tiled_res, atol=5e-3, rtol=5e-3), "streamed vs resident X"
    # Vs references: tight against the bf16-X-quantized ref, loose vs pure f32.
    assert jnp.allclose(out2_tiled_res, ref2_q, atol=1e-2, rtol=1e-2), "tiled vs quantized ref"
    assert jnp.allclose(out2_fused, ref2, atol=5e-2, rtol=5e-2), "fused vs f32 ref"

    print("KERNEL_OK")
</pallas_src>

<mosaic_0001>
module attributes {stable_mosaic.version = 11 : i64} {
  func.func @_gcn_fused_kernel(%arg0: memref<128x128xbf16, #tpu.memory_space<vmem>>, %arg1: memref<128x128xf32, #tpu.memory_space<vmem>>, %arg2: memref<128x1xf32, #tpu.memory_space<vmem>>, %arg3: memref<128x128xf32, #tpu.memory_space<vmem>>, %arg4: memref<128x128xf32, #tpu.memory_space<vmem>>, %arg5: memref<128x128xf32, #tpu.memory_space<vmem>>, %arg6: memref<1x128xf32, #tpu.memory_space<vmem>>, %arg7: memref<1x128xf32, #tpu.memory_space<vmem>>, %arg8: memref<1x128xf32, #tpu.memory_space<vmem>>, %arg9: memref<128x128xf32, #tpu.memory_space<vmem>>) attributes {dimension_semantics = [], scalar_prefetch = 0 : i64, scratch_operands = 0 : i64, tpu.core_type = #tpu.core_type<tc>} {
    %c0 = arith.constant 0 : index
    %c0_0 = arith.constant 0 : index
    %0 = vector.load %arg0[%c0, %c0_0] : memref<128x128xbf16, #tpu.memory_space<vmem>>, vector<128x128xbf16>
    %c0_1 = arith.constant 0 : index
    %c0_2 = arith.constant 0 : index
    %1 = vector.load %arg2[%c0_1, %c0_2] : memref<128x1xf32, #tpu.memory_space<vmem>>, vector<128x1xf32>
    %c0_3 = arith.constant 0 : index
    %c0_4 = arith.constant 0 : index
    %2 = vector.load %arg1[%c0_3, %c0_4] : memref<128x128xf32, #tpu.memory_space<vmem>>, vector<128x128xf32>
    %c0_5 = arith.constant 0 : index
    %c0_6 = arith.constant 0 : index
    %3 = vector.load %arg3[%c0_5, %c0_6] : memref<128x128xf32, #tpu.memory_space<vmem>>, vector<128x128xf32>
    %cst = arith.constant dense<0.000000e+00> : vector<128x128xf32>
    %4 = tpu.matmul %2, %3, %cst {dimension_numbers = #tpu.dot_dimension_numbers<[1], [0], [0], [1], [0, 0, 1, 1], [], []>} : vector<128x128xf32>, vector<128x128xf32>, vector<128x128xf32> -> vector<128x128xf32>
    %5 = vector.broadcast %1 : vector<128x1xf32> to vector<128x128xf32>
    %6 = arith.mulf %4, %5 : vector<128x128xf32>
    %7 = arith.truncf %6 : vector<128x128xf32> to vector<128x128xbf16>
    %cst_7 = arith.constant dense<0.000000e+00> : vector<128x128xf32>
    %8 = tpu.matmul %0, %7, %cst_7 {dimension_numbers = #tpu.dot_dimension_numbers<[1], [0], [0], [1], [0, 0, 1, 1], [], []>} : vector<128x128xbf16>, vector<128x128xbf16>, vector<128x128xf32> -> vector<128x128xf32>
    %9 = vector.broadcast %1 : vector<128x1xf32> to vector<128x128xf32>
    %10 = arith.mulf %8, %9 : vector<128x128xf32>
    %c0_8 = arith.constant 0 : index
    %c0_9 = arith.constant 0 : index
    %11 = vector.load %arg6[%c0_8, %c0_9] : memref<1x128xf32, #tpu.memory_space<vmem>>, vector<1x128xf32>
    %12 = vector.broadcast %11 : vector<1x128xf32> to vector<128x128xf32>
    %13 = arith.addf %10, %12 : vector<128x128xf32>
    %cst_10 = arith.constant 0.000000e+00 : f32
    %14 = vector.broadcast %cst_10 : f32 to vector<128x128xf32>
    %15 = arith.maximumf %13, %14 : vector<128x128xf32>
    %c0_11 = arith.constant 0 : index
    %c0_12 = arith.constant 0 : index
    %16 = vector.load %arg4[%c0_11, %c0_12] : memref<128x128xf32, #tpu.memory_space<vmem>>, vector<128x128xf32>
    %cst_13 = arith.constant dense<0.000000e+00> : vector<128x128xf32>
    %17 = tpu.matmul %15, %16, %cst_13 {dimension_numbers = #tpu.dot_dimension_numbers<[1], [0], [0], [1], [0, 0, 1, 1], [], []>} : vector<128x128xf32>, vector<128x128xf32>, vector<128x128xf32> -> vector<128x128xf32>
    %18 = vector.broadcast %1 : vector<128x1xf32> to vector<128x128xf32>
    %19 = arith.mulf %17, %18 : vector<128x128xf32>
    %20 = arith.truncf %19 : vector<128x128xf32> to vector<128x128xbf16>
    %cst_14 = arith.constant dense<0.000000e+00> : vector<128x128xf32>
    %21 = tpu.matmul %0, %20, %cst_14 {dimension_numbers = #tpu.dot_dimension_numbers<[1], [0], [0], [1], [0, 0, 1, 1], [], []>} : vector<128x128xbf16>, vector<128x128xbf16>, vector<128x128xf32> -> vector<128x128xf32>
    %22 = vector.broadcast %1 : vector<128x1xf32> to vector<128x128xf32>
    %23 = arith.mulf %21, %22 : vector<128x128xf32>
    %c0_15 = arith.constant 0 : index
    %c0_16 = arith.constant 0 : index
    %24 = vector.load %arg7[%c0_15, %c0_16] : memref<1x128xf32, #tpu.memory_space<vmem>>, vector<1x128xf32>
    %25 = vector.broadcast %24 : vector<1x128xf32> to vector<128x128xf32>
    %26 = arith.addf %23, %25 : vector<128x128xf32>
    %cst_17 = arith.constant 0.000000e+00 : f32
    %27 = vector.broadcast %cst_17 : f32 to vector<128x128xf32>
    %28 = arith.maximumf %26, %27 : vector<128x128xf32>
    %c0_18 = arith.constant 0 : index
    %c0_19 = arith.constant 0 : index
    %29 = vector.load %arg5[%c0_18, %c0_19] : memref<128x128xf32, #tpu.memory_space<vmem>>, vector<128x128xf32>
    %cst_20 = arith.constant dense<0.000000e+00> : vector<128x128xf32>
    %30 = tpu.matmul %28, %29, %cst_20 {dimension_numbers = #tpu.dot_dimension_numbers<[1], [0], [0], [1], [0, 0, 1, 1], [], []>} : vector<128x128xf32>, vector<128x128xf32>, vector<128x128xf32> -> vector<128x128xf32>
    %31 = vector.broadcast %1 : vector<128x1xf32> to vector<128x128xf32>
    %32 = arith.mulf %30, %31 : vector<128x128xf32>
    %33 = arith.truncf %32 : vector<128x128xf32> to vector<128x128xbf16>
    %cst_21 = arith.constant dense<0.000000e+00> : vector<128x128xf32>
    %34 = tpu.matmul %0, %33, %cst_21 {dimension_numbers = #tpu.dot_dimension_numbers<[1], [0], [0], [1], [0, 0, 1, 1], [], []>} : vector<128x128xbf16>, vector<128x128xbf16>, vector<128x128xf32> -> vector<128x128xf32>
    %35 = vector.broadcast %1 : vector<128x1xf32> to vector<128x128xf32>
    %36 = arith.mulf %34, %35 : vector<128x128xf32>
    %c0_22 = arith.constant 0 : index
    %c0_23 = arith.constant 0 : index
    %37 = vector.load %arg8[%c0_22, %c0_23] : memref<1x128xf32, #tpu.memory_space<vmem>>, vector<1x128xf32>
    %38 = vector.broadcast %37 : vector<1x128xf32> to vector<128x128xf32>
    %39 = arith.addf %36, %38 : vector<128x128xf32>
    %c0_24 = arith.constant 0 : index
    %c0_25 = arith.constant 0 : index
    %40 = vector.load %arg9[%c0_24, %c0_25] : memref<128x128xf32, #tpu.memory_space<vmem>>, vector<128x128xf32>
    tpu.vector_store %arg9[%c0_24, %c0_25], %39 {strides = array<i32>} : memref<128x128xf32, #tpu.memory_space<vmem>>, vector<128x128xf32>,
    return
  }
}

</mosaic_0001>

<llo_original>
// kernel: tpu_custom_call.1
$region0: #{tpu_custom_call.1}
  #allocation0 [shape = 'u32[]', space=smem, size = 0x4, offset = 0x4, fixed_abs, tag = 'smem constant byte address 0x4 - core index']
  #allocation1 [shape = 'u32[72,128]{1,0:T(1,128)}', space=vmem, size = 0x9000, scoped, tag = 'internal scratch']
  %s0 = inlined_call_operand.hbm [shape: bf16[128,128], index: 0, kind: input, shape index: {}]
  %s1 = inlined_call_operand.vmem [shape: f32[128,128], index: 1, kind: input, shape index: {}]
  %s2 = inlined_call_operand.vmem [shape: f32[128,1], index: 2, kind: input, shape index: {}]
  %s3 = inlined_call_operand.hbm [shape: f32[128,128], index: 3, kind: input, shape index: {}]
  %s4 = inlined_call_operand.hbm [shape: f32[128,128], index: 4, kind: input, shape index: {}]
  %s5 = inlined_call_operand.hbm [shape: f32[128,128], index: 5, kind: input, shape index: {}]
  %s6 = inlined_call_operand.vmem [shape: f32[1,128], index: 6, kind: input, shape index: {}]
  %s7 = inlined_call_operand.vmem [shape: f32[1,128], index: 7, kind: input, shape index: {}]
  %s8 = inlined_call_operand.vmem [shape: f32[1,128], index: 8, kind: input, shape index: {}]
  %s9 = inlined_call_operand.hbm [shape: f32[128,128], index: 9, kind: output, shape index: {}]
  %s10 = sld [smem:[#allocation0]]
  $region62: #{tpu_custom_call.1} parent=0
    _
  %s12 = ssub.s32 1, %s10
  %s13 = scalar_select 0, %s12, %s10
  $region1: #{tpu_custom_call.1} parent=0
    #allocation2 [shape = 'u8[32768]{0}', space=vmem, size = 0x8000, scoped, tag = 'input window, operand 0, single buffered']
    #allocation3 [shape = 's32[1]{0}', space=sflag, size = 0x4, scoped, tag = 'scoped memory for tpu_custom_call.1']
    #allocation4 [shape = 's32[1]{0}', space=sflag, size = 0x4, scoped, tag = 'scoped memory for tpu_custom_call.1']
    #allocation5 [shape = 'u8[65536]{0}', space=vmem, size = 0x10000, scoped, tag = 'input window, operand 3, single buffered']
    #allocation6 [shape = 's32[1]{0}', space=sflag, size = 0x4, scoped, tag = 'scoped memory for tpu_custom_call.1']
    #allocation7 [shape = 'u8[65536]{0}', space=vmem, size = 0x10000, scoped, tag = 'input window, operand 4, single buffered']
    #allocation8 [shape = 'u8[65536]{0}', space=vmem, size = 0x10000, scoped, tag = 'input window, operand 5, single buffered']
    #allocation9 [shape = 's32[1]{0}', space=sflag, size = 0x4, scoped, tag = 'scoped memory for tpu_custom_call.1']
    #allocation10 [shape = 'u8[65536]{0}', space=vmem, size = 0x10000, scoped, tag = 'output window, operand 0, single buffered']
    %14 = vsyncpa [#allocation3], 0
    %15 = vsyncpa [#allocation6], 0
    %16 = vsyncpa [#allocation9], 0
    %17 = vsyncpa [#allocation4], 0
    // Predicated region
    $region2: #{tpu_custom_call.1} parent=1 // pred_check
      _
    $region3: #{tpu_custom_call.1} parent=1 // pred_check_branch
      %19 = sbr.rel (0) target = $region5
    $region4: #{tpu_custom_call.1} parent=1 // pred_region
      %21 = vsyncadd [#allocation3], 0
      %s22 = sshll.u32 %s0, 4
      %s23 = int_to_ptr.hbm [resolvable:$true] %s22
      %s24 = sshll.u32 [#allocation2], 4
      %s25 = int_to_ptr.vmem [resolvable:$true] %s24
      %30 = dma.hbm_to_vmem [thread:$0]  %s23, 1024, %s25, [#allocation3], 64, 64, 4
    $region5: #{tpu_custom_call.1} parent=1 // pred_fallthru
      _
    // Predicated region
    $region6: #{tpu_custom_call.1} parent=1 // pred_check
      _
    $region7: #{tpu_custom_call.1} parent=1 // pred_check_branch
      %32 = sbr.rel (0) target = $region9
    $region8: #{tpu_custom_call.1} parent=1 // pred_region
      _
    $region9: #{tpu_custom_call.1} parent=1 // pred_fallthru
      _
    // Predicated region
    $region10: #{tpu_custom_call.1} parent=1 // pred_check
      _
    $region11: #{tpu_custom_call.1} parent=1 // pred_check_branch
      %34 = sbr.rel (0) target = $region13
    $region12: #{tpu_custom_call.1} parent=1 // pred_region
      _
    $region13: #{tpu_custom_call.1} parent=1 // pred_fallthru
      _
    // Predicated region
    $region14: #{tpu_custom_call.1} parent=1 // pred_check
      _
    $region15: #{tpu_custom_call.1} parent=1 // pred_check_branch
      %36 = sbr.rel (0) target = $region17
    $region16: #{tpu_custom_call.1} parent=1 // pred_region
      %38 = vsyncadd [#allocation6], 0
      %s39 = sshll.u32 %s3, 4
      %s40 = int_to_ptr.hbm [resolvable:$true] %s39
      %s41 = sshll.u32 [#allocation5], 4
      %s42 = int_to_ptr.vmem [resolvable:$true] %s41
      %47 = dma.hbm_to_vmem [thread:$0]  %s40, 2048, %s42, [#allocation6], 128, 128, 8
    $region17: #{tpu_custom_call.1} parent=1 // pred_fallthru
      _
    // Predicated region
    $region18: #{tpu_custom_call.1} parent=1 // pred_check
      _
    $region19: #{tpu_custom_call.1} parent=1 // pred_check_branch
      %49 = sbr.rel (0) target = $region21
    $region20: #{tpu_custom_call.1} parent=1 // pred_region
      %51 = vsyncadd [#allocation6], 0
      %s52 = sshll.u32 %s4, 4
      %s53 = int_to_ptr.hbm [resolvable:$true] %s52
      %s54 = sshll.u32 [#allocation7], 4
      %s55 = int_to_ptr.vmem [resolvable:$true] %s54
      %60 = dma.hbm_to_vmem [thread:$0]  %s53, 2048, %s55, [#allocation6], 128, 128, 8
    $region21: #{tpu_custom_call.1} parent=1 // pred_fallthru
      _
    // Predicated region
    $region22: #{tpu_custom_call.1} parent=1 // pred_check
      _
    $region23: #{tpu_custom_call.1} parent=1 // pred_check_branch
      %62 = sbr.rel (0) target = $region25
    $region24: #{tpu_custom_call.1} parent=1 // pred_region
      %64 = vsyncadd [#allocation9], 0
      %s65 = sshll.u32 %s5, 4
      %s66 = int_to_ptr.hbm [resolvable:$true] %s65
      %s67 = sshll.u32 [#allocation8], 4
      %s68 = int_to_ptr.vmem [resolvable:$true] %s67
      %73 = dma.hbm_to_vmem [thread:$0]  %s66, 2048, %s68, [#allocation9], 128, 128, 8
    $region25: #{tpu_custom_call.1} parent=1 // pred_fallthru
      _
    // Predicated region
    $region26: #{tpu_custom_call.1} parent=1 // pred_check
      _
    $region27: #{tpu_custom_call.1} parent=1 // pred_check_branch
      %75 = sbr.rel (0) target = $region29
    $region28: #{tpu_custom_call.1} parent=1 // pred_region
      _
    $region29: #{tpu_custom_call.1} parent=1 // pred_fallthru
      _
    // Predicated region
    $region30: #{tpu_custom_call.1} parent=1 // pred_check
      _
    $region31: #{tpu_custom_call.1} parent=1 // pred_check_branch
      %77 = sbr.rel (0) target = $region33
    $region32: #{tpu_custom_call.1} parent=1 // pred_region
      _
    $region33: #{tpu_custom_call.1} parent=1 // pred_fallthru
      _
    // Predicated region
    $region34: #{tpu_custom_call.1} parent=1 // pred_check
      _
    $region35: #{tpu_custom_call.1} parent=1 // pred_check_branch
      %79 = sbr.rel (0) target = $region37
    $region36: #{tpu_custom_call.1} parent=1 // pred_region
      _
    $region37: #{tpu_custom_call.1} parent=1 // pred_fallthru
      _
    // Predicated region
    $region38: #{tpu_custom_call.1} parent=1 // pred_check
      _
    $region39: #{tpu_custom_call.1} parent=1 // pred_check_branch
      %81 = sbr.rel (0) target = $region41
    $region40: #{tpu_custom_call.1} parent=1 // pred_region
      %83 = dma.done [#allocation3], 1024
    $region41: #{tpu_custom_call.1} parent=1 // pred_fallthru
      _
    // Predicated region
    $region42: #{tpu_custom_call.1} parent=1 // pred_check
      _
    $region43: #{tpu_custom_call.1} parent=1 // pred_check_branch
      %85 = sbr.rel (0) target = $region45
    $region44: #{tpu_custom_call.1} parent=1 // pred_region
      %87 = dma.done [#allocation6], 2048
    $region45: #{tpu_custom_call.1} parent=1 // pred_fallthru
      _
    // Predicated region
    $region46: #{tpu_custom_call.1} parent=1 // pred_check
      _
    $region47: #{tpu_custom_call.1} parent=1 // pred_check_branch
      %89 = sbr.rel (0) target = $region49
    $region48: #{tpu_custom_call.1} parent=1 // pred_region
      %91 = dma.done [#allocation6], 2048
    $region49: #{tpu_custom_call.1} parent=1 // pred_fallthru
      _
    // Predicated region
    $region50: #{tpu_custom_call.1} parent=1 // pred_check
      _
    $region51: #{tpu_custom_call.1} parent=1 // pred_check_branch
      %93 = sbr.rel (0) target = $region53
    $region52: #{tpu_custom_call.1} parent=1 // pred_region
      %95 = dma.done [#allocation9], 2048
    $region53: #{tpu_custom_call.1} parent=1 // pred_fallthru
      _
    %v96 = vld [vmem:[#allocation2] sm:$0xf]
    %v97 = vld [vmem:[#allocation2 + $0x4] sm:$0xf]
    %v98 = vld [vmem:[#allocation2 + $0x8] sm:$0xf]
    %v99 = vld [vmem:[#allocation2 + $0xc] sm:$0xf]
    %v100 = vld [vmem:[#allocation2 + $0x10] sm:$0xf]
    %v101 = vld [vmem:[#allocation2 + $0x14] sm:$0xf]
    %v102 = vld [vmem:[#allocation2 + $0x18] sm:$0xf]
    %v103 = vld [vmem:[#allocation2 + $0x1c] sm:$0xf]
    %v104 = vld [vmem:[#allocation2 + $0x20] sm:$0xf]
    %v105 = vld [vmem:[#allocation2 + $0x24] sm:$0xf]
    %v106 = vld [vmem:[#allocation2 + $0x28] sm:$0xf]
    %v107 = vld [vmem:[#allocation2 + $0x2c] sm:$0xf]
    %v108 = vld [vmem:[#allocation2 + $0x30] sm:$0xf]
    %v109 = vld [vmem:[#allocation2 + $0x34] sm:$0xf]
    %v110 = vld [vmem:[#allocation2 + $0x38] sm:$0xf]
    %v111 = vld [vmem:[#allocation2 + $0x3c] sm:$0xf]
    %v112 = vld [vmem:[%s2] sm:$0xff]
    %v113 = vld [vmem:[%s2 + $0x8] sm:$0xff]
    %v114 = vld [vmem:[%s2 + $0x10] sm:$0xff]
    %v115 = vld [vmem:[%s2 + $0x18] sm:$0xff]
    %v116 = vld [vmem:[%s2 + $0x20] sm:$0xff]
    %v117 = vld [vmem:[%s2 + $0x28] sm:$0xff]
    %v118 = vld [vmem:[%s2 + $0x30] sm:$0xff]
    %v119 = vld [vmem:[%s2 + $0x38] sm:$0xff]
    %v120 = vld [vmem:[%s2 + $0x40] sm:$0xff]
    %v121 = vld [vmem:[%s2 + $0x48] sm:$0xff]
    %v122 = vld [vmem:[%s2 + $0x50] sm:$0xff]
    %v123 = vld [vmem:[%s2 + $0x58] sm:$0xff]
    %v124 = vld [vmem:[%s2 + $0x60] sm:$0xff]
    %v125 = vld [vmem:[%s2 + $0x68] sm:$0xff]
    %v126 = vld [vmem:[%s2 + $0x70] sm:$0xff]
    %v127 = vld [vmem:[%s2 + $0x78] sm:$0xff]
    %v128 = vld [vmem:[%s1] sm:$0xff]
    %v129 = vld [vmem:[%s1 + $0x8] sm:$0xff]
    %v130 = vld [vmem:[%s1 + $0x10] sm:$0xff]
    %v131 = vld [vmem:[%s1 + $0x18] sm:$0xff]
    %v132 = vld [vmem:[%s1 + $0x20] sm:$0xff]
    %v133 = vld [vmem:[%s1 + $0x28] sm:$0xff]
    %v134 = vld [vmem:[%s1 + $0x30] sm:$0xff]
    %v135 = vld [vmem:[%s1 + $0x38] sm:$0xff]
    %v136 = vld [vmem:[%s1 + $0x40] sm:$0xff]
    %v137 = vld [vmem:[%s1 + $0x48] sm:$0xff]
    %v138 = vld [vmem:[%s1 + $0x50] sm:$0xff]
    %v139 = vld [vmem:[%s1 + $0x58] sm:$0xff]
    %v140 = vld [vmem:[%s1 + $0x60] sm:$0xff]
    %v141 = vld [vmem:[%s1 + $0x68] sm:$0xff]
    %v142 = vld [vmem:[%s1 + $0x70] sm:$0xff]
    %v143 = vld [vmem:[%s1 + $0x78] sm:$0xff]
    %v144 = vld [vmem:[#allocation5] sm:$0xff]
    %v145 = vld [vmem:[#allocation5 + $0x8] sm:$0xff]
    %v146 = vld [vmem:[#allocation5 + $0x10] sm:$0xff]
    %v147 = vld [vmem:[#allocation5 + $0x18] sm:$0xff]
    %v148 = vld [vmem:[#allocation5 + $0x20] sm:$0xff]
    %v149 = vld [vmem:[#allocation5 + $0x28] sm:$0xff]
    %v150 = vld [vmem:[#allocation5 + $0x30] sm:$0xff]
    %v151 = vld [vmem:[#allocation5 + $0x38] sm:$0xff]
    %v152 = vld [vmem:[#allocation5 + $0x40] sm:$0xff]
    %v153 = vld [vmem:[#allocation5 + $0x48] sm:$0xff]
    %v154 = vld [vmem:[#allocation5 + $0x50] sm:$0xff]
    %v155 = vld [vmem:[#allocation5 + $0x58] sm:$0xff]
    %v156 = vld [vmem:[#allocation5 + $0x60] sm:$0xff]
    %v157 = vld [vmem:[#allocation5 + $0x68] sm:$0xff]
    %v158 = vld [vmem:[#allocation5 + $0x70] sm:$0xff]
    %v159 = vld [vmem:[#allocation5 + $0x78] sm:$0xff]
    %160 = vmatpush.msra.mxu0 %v159
    %161 = vmatpush.msra.mxu0 %v158
    %162 = vmatpush.msra.mxu0 %v157
    %163 = vmatpush.msra.mxu0 %v156
    %164 = vmatpush.msra.mxu0 %v155
    %165 = vmatpush.msra.mxu0 %v154
    %166 = vmatpush.msra.mxu0 %v153
    %167 = vmatpush.msra.mxu0 %v152
    %168 = vmatpush.msra.mxu0 %v151
    %169 = vmatpush.msra.mxu0 %v150
    %170 = vmatpush.msra.mxu0 %v149
    %171 = vmatpush.msra.mxu0 %v148
    %172 = vmatpush.msra.mxu0 %v147
    %173 = vmatpush.msra.mxu0 %v146
    %174 = vmatpush.msra.mxu0 %v145
    %175 = vmatpush.msra.mxu0 %v144
    %176 = vmatmul.f32.gmra.mxu0 %v128
    %v177 = vpop.f32.mrf.mxu0
    %v178 = vadd.f32 0.0, %v177
    %179 = vmatmul.f32.gmra.mxu0 %v129
    %v180 = vpop.f32.mrf.mxu0
    %v181 = vadd.f32 0.0, %v180
    %182 = vmatmul.f32.gmra.mxu0 %v130
    %v183 = vpop.f32.mrf.mxu0
    %v184 = vadd.f32 0.0, %v183
    %185 = vmatmul.f32.gmra.mxu0 %v131
    %v186 = vpop.f32.mrf.mxu0
    %v187 = vadd.f32 0.0, %v186
    %188 = vmatmul.f32.gmra.mxu0 %v132
    %v189 = vpop.f32.mrf.mxu0
    %v190 = vadd.f32 0.0, %v189
    %191 = vmatmul.f32.gmra.mxu0 %v133
    %v192 = vpop.f32.mrf.mxu0
    %v193 = vadd.f32 0.0, %v192
    %194 = vmatmul.f32.gmra.mxu0 %v134
    %v195 = vpop.f32.mrf.mxu0
    %v196 = vadd.f32 0.0, %v195
    %197 = vmatmul.f32.gmra.mxu0 %v135
    %v198 = vpop.f32.mrf.mxu0
    %v199 = vadd.f32 0.0, %v198
    %200 = vmatmul.f32.gmra.mxu0 %v136
    %v201 = vpop.f32.mrf.mxu0
    %v202 = vadd.f32 0.0, %v201
    %203 = vmatmul.f32.gmra.mxu0 %v137
    %v204 = vpop.f32.mrf.mxu0
    %v205 = vadd.f32 0.0, %v204
    %206 = vmatmul.f32.gmra.mxu0 %v138
    %v207 = vpop.f32.mrf.mxu0
    %v208 = vadd.f32 0.0, %v207
    %209 = vmatmul.f32.gmra.mxu0 %v139
    %v210 = vpop.f32.mrf.mxu0
    %v211 = vadd.f32 0.0, %v210
    %212 = vmatmul.f32.gmra.mxu0 %v140
    %v213 = vpop.f32.mrf.mxu0
    %v214 = vadd.f32 0.0, %v213
    %215 = vmatmul.f32.gmra.mxu0 %v141
    %v216 = vpop.f32.mrf.mxu0
    %v217 = vadd.f32 0.0, %v216
    %218 = vmatmul.f32.gmra.mxu0 %v142
    %v219 = vpop.f32.mrf.mxu0
    %v220 = vadd.f32 0.0, %v219
    %221 = vmatmul.f32.gmra.mxu0 %v143
    %v222 = vpop.f32.mrf.mxu0
    %v223 = vadd.f32 0.0, %v222
    %224 = vdwg.mxu0
    %226 = vset.pattern.permute.xlu0 0
    %227 = vperm.xlu0 %226, %v112
    %v228 = vpop.permute.xlu0 %227
    %231 = vset.pattern.permute.xlu0 0
    %232 = vperm.xlu0 %231, %v113
    %v233 = vpop.permute.xlu0 %232
    %236 = vset.pattern.permute.xlu0 0
    %237 = vperm.xlu0 %236, %v114
    %v238 = vpop.permute.xlu0 %237
    %241 = vset.pattern.permute.xlu0 0
    %242 = vperm.xlu0 %241, %v115
    %v243 = vpop.permute.xlu0 %242
    %246 = vset.pattern.permute.xlu0 0
    %247 = vperm.xlu0 %246, %v116
    %v248 = vpop.permute.xlu0 %247
    %251 = vset.pattern.permute.xlu0 0
    %252 = vperm.xlu0 %251, %v117
    %v253 = vpop.permute.xlu0 %252
    %256 = vset.pattern.permute.xlu0 0
    %257 = vperm.xlu0 %256, %v118
    %v258 = vpop.permute.xlu0 %257
    %261 = vset.pattern.permute.xlu0 0
    %262 = vperm.xlu0 %261, %v119
    %v263 = vpop.permute.xlu0 %262
    %266 = vset.pattern.permute.xlu0 0
    %267 = vperm.xlu0 %266, %v120
    %v268 = vpop.permute.xlu0 %267
    %271 = vset.pattern.permute.xlu0 0
    %272 = vperm.xlu0 %271, %v121
    %v273 = vpop.permute.xlu0 %272
    %276 = vset.pattern.permute.xlu0 0
    %277 = vperm.xlu0 %276, %v122
    %v278 = vpop.permute.xlu0 %277
    %281 = vset.pattern.permute.xlu0 0
    %282 = vperm.xlu0 %281, %v123
    %v283 = vpop.permute.xlu0 %282
    %286 = vset.pattern.permute.xlu0 0
    %287 = vperm.xlu0 %286, %v124
    %v288 = vpop.permute.xlu0 %287
    %291 = vset.pattern.permute.xlu0 0
    %292 = vperm.xlu0 %291, %v125
    %v293 = vpop.permute.xlu0 %292
    %296 = vset.pattern.permute.xlu0 0
    %297 = vperm.xlu0 %296, %v126
    %v298 = vpop.permute.xlu0 %297
    %301 = vset.pattern.permute.xlu0 0
    %302 = vperm.xlu0 %301, %v127
    %v303 = vpop.permute.xlu0 %302
    %v305 = vmul.f32 %v178, %v228
    %v306 = vmul.f32 %v181, %v233
    %v307 = vmul.f32 %v184, %v238
    %v308 = vmul.f32 %v187, %v243
    %v309 = vmul.f32 %v190, %v248
    %v310 = vmul.f32 %v193, %v253
    %v311 = vmul.f32 %v196, %v258
    %v312 = vmul.f32 %v199, %v263
    %v313 = vmul.f32 %v202, %v268
    %v314 = vmul.f32 %v205, %v273
    %v315 = vmul.f32 %v208, %v278
    %v316 = vmul.f32 %v211, %v283
    %v317 = vmul.f32 %v214, %v288
    %v318 = vmul.f32 %v217, %v293
    %v319 = vmul.f32 %v220, %v298
    %v320 = vmul.f32 %v223, %v303
    %v321 = vpack.c.bf16 %v306, %v305
    %v322 = vpack.c.bf16 %v308, %v307
    %v323 = vpack.c.bf16 %v310, %v309
    %v324 = vpack.c.bf16 %v312, %v311
    %v325 = vpack.c.bf16 %v314, %v313
    %v326 = vpack.c.bf16 %v316, %v315
    %v327 = vpack.c.bf16 %v318, %v317
    %v328 = vpack.c.bf16 %v320, %v319
    %v345 = vunpack.c.l.b16 %v96
    %v346 = vunpack.c.l.b16 %v97
    %v347 = vunpack.c.l.b16 %v98
    %v348 = vunpack.c.l.b16 %v99
    %v349 = vunpack.c.l.b16 %v100
    %v350 = vunpack.c.l.b16 %v101
    %v351 = vunpack.c.l.b16 %v102
    %v352 = vunpack.c.l.b16 %v103
    %v353 = vunpack.c.l.b16 %v104
    %v354 = vunpack.c.l.b16 %v105
    %v355 = vunpack.c.l.b16 %v106
    %v356 = vunpack.c.l.b16 %v107
    %v357 = vunpack.c.l.b16 %v108
    %v358 = vunpack.c.l.b16 %v109
    %v359 = vunpack.c.l.b16 %v110
    %v360 = vunpack.c.l.b16 %v111
    %v361 = vpack.c.b16 %v346, %v345
    %v362 = vpack.c.b16 %v348, %v347
    %v363 = vpack.c.b16 %v350, %v349
    %v364 = vpack.c.b16 %v352, %v351
    %v365 = vpack.c.b16 %v354, %v353
    %v366 = vpack.c.b16 %v356, %v355
    %v367 = vpack.c.b16 %v358, %v357
    %v368 = vpack.c.b16 %v360, %v359
    %377 = vmatpush.bf16.msra.mxu0 %v328
    %378 = vmatpush.bf16.msra.mxu0 %v327
    %379 = vmatpush.bf16.msra.mxu0 %v326
    %380 = vmatpush.bf16.msra.mxu0 %v325
    %381 = vmatpush.bf16.msra.mxu0 %v324
    %382 = vmatpush.bf16.msra.mxu0 %v323
    %383 = vmatpush.bf16.msra.mxu0 %v322
    %384 = vmatpush.bf16.msra.mxu0 %v321
    %385 = vmatmul.bf16.gmra.mxu0 %v361
    %v386 = vpop.f32.mrf.mxu0
    %v387 = vadd.f32 0.0, %v386
    %v388 = vpop.f32.mrf.mxu0
    %v389 = vadd.f32 0.0, %v388
    %390 = vmatmul.bf16.gmra.mxu0 %v362
    %v391 = vpop.f32.mrf.mxu0
    %v392 = vadd.f32 0.0, %v391
    %v393 = vpop.f32.mrf.mxu0
    %v394 = vadd.f32 0.0, %v393
    %395 = vmatmul.bf16.gmra.mxu0 %v363
    %v396 = vpop.f32.mrf.mxu0
    %v397 = vadd.f32 0.0, %v396
    %v398 = vpop.f32.mrf.mxu0
    %v399 = vadd.f32 0.0, %v398
    %400 = vmatmul.bf16.gmra.mxu0 %v364
    %v401 = vpop.f32.mrf.mxu0
    %v402 = vadd.f32 0.0, %v401
    %v403 = vpop.f32.mrf.mxu0
    %v404 = vadd.f32 0.0, %v403
    %405 = vmatmul.bf16.gmra.mxu0 %v365
    %v406 = vpop.f32.mrf.mxu0
    %v407 = vadd.f32 0.0, %v406
    %v408 = vpop.f32.mrf.mxu0
    %v409 = vadd.f32 0.0, %v408
    %410 = vmatmul.bf16.gmra.mxu0 %v366
    %v411 = vpop.f32.mrf.mxu0
    %v412 = vadd.f32 0.0, %v411
    %v413 = vpop.f32.mrf.mxu0
    %v414 = vadd.f32 0.0, %v413
    %415 = vmatmul.bf16.gmra.mxu0 %v367
    %v416 = vpop.f32.mrf.mxu0
    %v417 = vadd.f32 0.0, %v416
    %v418 = vpop.f32.mrf.mxu0
    %v419 = vadd.f32 0.0, %v418
    %420 = vmatmul.bf16.gmra.mxu0 %v368
    %v421 = vpop.f32.mrf.mxu0
    %v422 = vadd.f32 0.0, %v421
    %v423 = vpop.f32.mrf.mxu0
    %v424 = vadd.f32 0.0, %v423
    %425 = vdwg.mxu0
    %v426 = vmul.f32 %v387, %v228
    %v427 = vmul.f32 %v389, %v233
    %v428 = vmul.f32 %v392, %v238
    %v429 = vmul.f32 %v394, %v243
    %v430 = vmul.f32 %v397, %v248
    %v431 = vmul.f32 %v399, %v253
    %v432 = vmul.f32 %v402, %v258
    %v433 = vmul.f32 %v404, %v263
    %v434 = vmul.f32 %v407, %v268
    %v435 = vmul.f32 %v409, %v273
    %v436 = vmul.f32 %v412, %v278
    %v437 = vmul.f32 %v414, %v283
    %v438 = vmul.f32 %v417, %v288
    %v439 = vmul.f32 %v419, %v293
    %v440 = vmul.f32 %v422, %v298
    %v441 = vmul.f32 %v424, %v303
    %v442 = vld [vmem:[%s6] sm:$0x1]
    %v444 = vperm.slane %v442, 0
    %v446 = vadd.f32 %v426, %v444
    %v447 = vadd.f32 %v427, %v444
    %v448 = vadd.f32 %v428, %v444
    %v449 = vadd.f32 %v429, %v444
    %v450 = vadd.f32 %v430, %v444
    %v451 = vadd.f32 %v431, %v444
    %v452 = vadd.f32 %v432, %v444
    %v453 = vadd.f32 %v433, %v444
    %v454 = vadd.f32 %v434, %v444
    %v455 = vadd.f32 %v435, %v444
    %v456 = vadd.f32 %v436, %v444
    %v457 = vadd.f32 %v437, %v444
    %v458 = vadd.f32 %v438, %v444
    %v459 = vadd.f32 %v439, %v444
    %v460 = vadd.f32 %v440, %v444
    %v461 = vadd.f32 %v441, %v444
    %v462 = vmax.f32 %v446, 0.0
    %v463 = vmax.f32 %v447, 0.0
    %v464 = vmax.f32 %v448, 0.0
    %v465 = vmax.f32 %v449, 0.0
    %v466 = vmax.f32 %v450, 0.0
    %v467 = vmax.f32 %v451, 0.0
    %v468 = vmax.f32 %v452, 0.0
    %v469 = vmax.f32 %v453, 0.0
    %v470 = vmax.f32 %v454, 0.0
    %v471 = vmax.f32 %v455, 0.0
    %v472 = vmax.f32 %v456, 0.0
    %v473 = vmax.f32 %v457, 0.0
    %v474 = vmax.f32 %v458, 0.0
    %v475 = vmax.f32 %v459, 0.0
    %v476 = vmax.f32 %v460, 0.0
    %v477 = vmax.f32 %v461, 0.0
    %v478 = vld [vmem:[#allocation7] sm:$0xff]
    %v479 = vld [vmem:[#allocation7 + $0x8] sm:$0xff]
    %v480 = vld [vmem:[#allocation7 + $0x10] sm:$0xff]
    %v481 = vld [vmem:[#allocation7 + $0x18] sm:$0xff]
    %v482 = vld [vmem:[#allocation7 + $0x20] sm:$0xff]
    %v483 = vld [vmem:[#allocation7 + $0x28] sm:$0xff]
    %v484 = vld [vmem:[#allocation7 + $0x30] sm:$0xff]
    %v485 = vld [vmem:[#allocation7 + $0x38] sm:$0xff]
    %v486 = vld [vmem:[#allocation7 + $0x40] sm:$0xff]
    %v487 = vld [vmem:[#allocation7 + $0x48] sm:$0xff]
    %v488 = vld [vmem:[#allocation7 + $0x50] sm:$0xff]
    %v489 = vld [vmem:[#allocation7 + $0x58] sm:$0xff]
    %v490 = vld [vmem:[#allocation7 + $0x60] sm:$0xff]
    %v491 = vld [vmem:[#allocation7 + $0x68] sm:$0xff]
    %v492 = vld [vmem:[#allocation7 + $0x70] sm:$0xff]
    %v493 = vld [vmem:[#allocation7 + $0x78] sm:$0xff]
    %494 = vmatpush.msra.mxu0 %v493
    %495 = vmatpush.msra.mxu0 %v492
    %496 = vmatpush.msra.mxu0 %v491
    %497 = vmatpush.msra.mxu0 %v490
    %498 = vmatpush.msra.mxu0 %v489
    %499 = vmatpush.msra.mxu0 %v488
    %500 = vmatpush.msra.mxu0 %v487
    %501 = vmatpush.msra.mxu0 %v486
    %502 = vmatpush.msra.mxu0 %v485
    %503 = vmatpush.msra.mxu0 %v484
    %504 = vmatpush.msra.mxu0 %v483
    %505 = vmatpush.msra.mxu0 %v482
    %506 = vmatpush.msra.mxu0 %v481
    %507 = vmatpush.msra.mxu0 %v480
    %508 = vmatpush.msra.mxu0 %v479
    %509 = vmatpush.msra.mxu0 %v478
    %510 = vmatmul.f32.gmra.mxu0 %v462
    %v511 = vpop.f32.mrf.mxu0
    %v512 = vadd.f32 0.0, %v511
    %513 = vmatmul.f32.gmra.mxu0 %v463
    %v514 = vpop.f32.mrf.mxu0
    %v515 = vadd.f32 0.0, %v514
    %516 = vmatmul.f32.gmra.mxu0 %v464
    %v517 = vpop.f32.mrf.mxu0
    %v518 = vadd.f32 0.0, %v517
    %519 = vmatmul.f32.gmra.mxu0 %v465
    %v520 = vpop.f32.mrf.mxu0
    %v521 = vadd.f32 0.0, %v520
    %522 = vmatmul.f32.gmra.mxu0 %v466
    %v523 = vpop.f32.mrf.mxu0
    %v524 = vadd.f32 0.0, %v523
    %525 = vmatmul.f32.gmra.mxu0 %v467
    %v526 = vpop.f32.mrf.mxu0
    %v527 = vadd.f32 0.0, %v526
    %528 = vmatmul.f32.gmra.mxu0 %v468
    %v529 = vpop.f32.mrf.mxu0
    %v530 = vadd.f32 0.0, %v529
    %531 = vmatmul.f32.gmra.mxu0 %v469
    %v532 = vpop.f32.mrf.mxu0
    %v533 = vadd.f32 0.0, %v532
    %534 = vmatmul.f32.gmra.mxu0 %v470
    %v535 = vpop.f32.mrf.mxu0
    %v536 = vadd.f32 0.0, %v535
    %537 = vmatmul.f32.gmra.mxu0 %v471
    %v538 = vpop.f32.mrf.mxu0
    %v539 = vadd.f32 0.0, %v538
    %540 = vmatmul.f32.gmra.mxu0 %v472
    %v541 = vpop.f32.mrf.mxu0
    %v542 = vadd.f32 0.0, %v541
    %543 = vmatmul.f32.gmra.mxu0 %v473
    %v544 = vpop.f32.mrf.mxu0
    %v545 = vadd.f32 0.0, %v544
    %546 = vmatmul.f32.gmra.mxu0 %v474
    %v547 = vpop.f32.mrf.mxu0
    %v548 = vadd.f32 0.0, %v547
    %549 = vmatmul.f32.gmra.mxu0 %v475
    %v550 = vpop.f32.mrf.mxu0
    %v551 = vadd.f32 0.0, %v550
    %552 = vmatmul.f32.gmra.mxu0 %v476
    %v553 = vpop.f32.mrf.mxu0
    %v554 = vadd.f32 0.0, %v553
    %555 = vmatmul.f32.gmra.mxu0 %v477
    %v556 = vpop.f32.mrf.mxu0
    %v557 = vadd.f32 0.0, %v556
    %558 = vdwg.mxu0
    %v559 = vmul.f32 %v512, %v228
    %v560 = vmul.f32 %v515, %v233
    %v561 = vmul.f32 %v518, %v238
    %v562 = vmul.f32 %v521, %v243
    %v563 = vmul.f32 %v524, %v248
    %v564 = vmul.f32 %v527, %v253
    %v565 = vmul.f32 %v530, %v258
    %v566 = vmul.f32 %v533, %v263
    %v567 = vmul.f32 %v536, %v268
    %v568 = vmul.f32 %v539, %v273
    %v569 = vmul.f32 %v542, %v278
    %v570 = vmul.f32 %v545, %v283
    %v571 = vmul.f32 %v548, %v288
    %v572 = vmul.f32 %v551, %v293
    %v573 = vmul.f32 %v554, %v298
    %v574 = vmul.f32 %v557, %v303
    %v575 = vpack.c.bf16 %v560, %v559
    %v576 = vpack.c.bf16 %v562, %v561
    %v577 = vpack.c.bf16 %v564, %v563
    %v578 = vpack.c.bf16 %v566, %v565
    %v579 = vpack.c.bf16 %v568, %v567
    %v580 = vpack.c.bf16 %v570, %v569
    %v581 = vpack.c.bf16 %v572, %v571
    %v582 = vpack.c.bf16 %v574, %v573
    %583 = vmatpush.bf16.msra.mxu0 %v582
    %584 = vmatpush.bf16.msra.mxu0 %v581
    %585 = vmatpush.bf16.msra.mxu0 %v580
    %586 = vmatpush.bf16.msra.mxu0 %v579
    %587 = vmatpush.bf16.msra.mxu0 %v578
    %588 = vmatpush.bf16.msra.mxu0 %v577
    %589 = vmatpush.bf16.msra.mxu0 %v576
    %590 = vmatpush.bf16.msra.mxu0 %v575
    %591 = vmatmul.bf16.gmra.mxu0 %v361
    %v592 = vpop.f32.mrf.mxu0
    %v593 = vadd.f32 0.0, %v592
    %v594 = vpop.f32.mrf.mxu0
    %v595 = vadd.f32 0.0, %v594
    %596 = vmatmul.bf16.gmra.mxu0 %v362
    %v597 = vpop.f32.mrf.mxu0
    %v598 = vadd.f32 0.0, %v597
    %v599 = vpop.f32.mrf.mxu0
    %v600 = vadd.f32 0.0, %v599
    %601 = vmatmul.bf16.gmra.mxu0 %v363
    %v602 = vpop.f32.mrf.mxu0
    %v603 = vadd.f32 0.0, %v602
    %v604 = vpop.f32.mrf.mxu0
    %v605 = vadd.f32 0.0, %v604
    %606 = vmatmul.bf16.gmra.mxu0 %v364
    %v607 = vpop.f32.mrf.mxu0
    %v608 = vadd.f32 0.0, %v607
    %v609 = vpop.f32.mrf.mxu0
    %v610 = vadd.f32 0.0, %v609
    %611 = vmatmul.bf16.gmra.mxu0 %v365
    %v612 = vpop.f32.mrf.mxu0
    %v613 = vadd.f32 0.0, %v612
    %v614 = vpop.f32.mrf.mxu0
    %v615 = vadd.f32 0.0, %v614
    %616 = vmatmul.bf16.gmra.mxu0 %v366
    %v617 = vpop.f32.mrf.mxu0
    %v618 = vadd.f32 0.0, %v617
    %v619 = vpop.f32.mrf.mxu0
    %v620 = vadd.f32 0.0, %v619
    %621 = vmatmul.bf16.gmra.mxu0 %v367
    %v622 = vpop.f32.mrf.mxu0
    %v623 = vadd.f32 0.0, %v622
    %v624 = vpop.f32.mrf.mxu0
    %v625 = vadd.f32 0.0, %v624
    %626 = vmatmul.bf16.gmra.mxu0 %v368
    %v627 = vpop.f32.mrf.mxu0
    %v628 = vadd.f32 0.0, %v627
    %v629 = vpop.f32.mrf.mxu0
    %v630 = vadd.f32 0.0, %v629
    %631 = vdwg.mxu0
    %v632 = vmul.f32 %v593, %v228
    %v633 = vmul.f32 %v595, %v233
    %v634 = vmul.f32 %v598, %v238
    %v635 = vmul.f32 %v600, %v243
    %v636 = vmul.f32 %v603, %v248
    %v637 = vmul.f32 %v605, %v253
    %v638 = vmul.f32 %v608, %v258
    %v639 = vmul.f32 %v610, %v263
    %v640 = vmul.f32 %v613, %v268
    %v641 = vmul.f32 %v615, %v273
    %v642 = vmul.f32 %v618, %v278
    %v643 = vmul.f32 %v620, %v283
    %v644 = vmul.f32 %v623, %v288
    %v645 = vmul.f32 %v625, %v293
    %v646 = vmul.f32 %v628, %v298
    %v647 = vmul.f32 %v630, %v303
    %v648 = vld [vmem:[%s7] sm:$0x1]
    %v650 = vperm.slane %v648, 0
    %v652 = vadd.f32 %v632, %v650
    %v653 = vadd.f32 %v633, %v650
    %v654 = vadd.f32 %v634, %v650
    %v655 = vadd.f32 %v635, %v650
    %v656 = vadd.f32 %v636, %v650
    %v657 = vadd.f32 %v637, %v650
    %v658 = vadd.f32 %v638, %v650
    %v659 = vadd.f32 %v639, %v650
    %v660 = vadd.f32 %v640, %v650
    %v661 = vadd.f32 %v641, %v650
    %v662 = vadd.f32 %v642, %v650
    %v663 = vadd.f32 %v643, %v650
    %v664 = vadd.f32 %v644, %v650
    %v665 = vadd.f32 %v645, %v650
    %v666 = vadd.f32 %v646, %v650
    %v667 = vadd.f32 %v647, %v650
    %v668 = vmax.f32 %v652, 0.0
    %v669 = vmax.f32 %v653, 0.0
    %v670 = vmax.f32 %v654, 0.0
    %v671 = vmax.f32 %v655, 0.0
    %v672 = vmax.f32 %v656, 0.0
    %v673 = vmax.f32 %v657, 0.0
    %v674 = vmax.f32 %v658, 0.0
    %v675 = vmax.f32 %v659, 0.0
    %v676 = vmax.f32 %v660, 0.0
    %v677 = vmax.f32 %v661, 0.0
    %v678 = vmax.f32 %v662, 0.0
    %v679 = vmax.f32 %v663, 0.0
    %v680 = vmax.f32 %v664, 0.0
    %v681 = vmax.f32 %v665, 0.0
    %v682 = vmax.f32 %v666, 0.0
    %v683 = vmax.f32 %v667, 0.0
    %v684 = vld [vmem:[#allocation8] sm:$0xff]
    %v685 = vld [vmem:[#allocation8 + $0x8] sm:$0xff]
    %v686 = vld [vmem:[#allocation8 + $0x10] sm:$0xff]
    %v687 = vld [vmem:[#allocation8 + $0x18] sm:$0xff]
    %v688 = vld [vmem:[#allocation8 + $0x20] sm:$0xff]
    %v689 = vld [vmem:[#allocation8 + $0x28] sm:$0xff]
    %v690 = vld [vmem:[#allocation8 + $0x30] sm:$0xff]
    %v691 = vld [vmem:[#allocation8 + $0x38] sm:$0xff]
    %v692 = vld [vmem:[#allocation8 + $0x40] sm:$0xff]
    %v693 = vld [vmem:[#allocation8 + $0x48] sm:$0xff]
    %v694 = vld [vmem:[#allocation8 + $0x50] sm:$0xff]
    %v695 = vld [vmem:[#allocation8 + $0x58] sm:$0xff]
    %v696 = vld [vmem:[#allocation8 + $0x60] sm:$0xff]
    %v697 = vld [vmem:[#allocation8 + $0x68] sm:$0xff]
    %v698 = vld [vmem:[#allocation8 + $0x70] sm:$0xff]
    %v699 = vld [vmem:[#allocation8 + $0x78] sm:$0xff]
    %700 = vmatpush.msra.mxu0 %v699
    %701 = vmatpush.msra.mxu0 %v698
    %702 = vmatpush.msra.mxu0 %v697
    %703 = vmatpush.msra.mxu0 %v696
    %704 = vmatpush.msra.mxu0 %v695
    %705 = vmatpush.msra.mxu0 %v694
    %706 = vmatpush.msra.mxu0 %v693
    %707 = vmatpush.msra.mxu0 %v692
    %708 = vmatpush.msra.mxu0 %v691
    %709 = vmatpush.msra.mxu0 %v690
    %710 = vmatpush.msra.mxu0 %v689
    %711 = vmatpush.msra.mxu0 %v688
    %712 = vmatpush.msra.mxu0 %v687
    %713 = vmatpush.msra.mxu0 %v686
    %714 = vmatpush.msra.mxu0 %v685
    %715 = vmatpush.msra.mxu0 %v684
    %716 = vmatmul.f32.gmra.mxu0 %v668
    %v717 = vpop.f32.mrf.mxu0
    %v718 = vadd.f32 0.0, %v717
    %719 = vmatmul.f32.gmra.mxu0 %v669
    %v720 = vpop.f32.mrf.mxu0
    %v721 = vadd.f32 0.0, %v720
    %722 = vmatmul.f32.gmra.mxu0 %v670
    %v723 = vpop.f32.mrf.mxu0
    %v724 = vadd.f32 0.0, %v723
    %725 = vmatmul.f32.gmra.mxu0 %v671
    %v726 = vpop.f32.mrf.mxu0
    %v727 = vadd.f32 0.0, %v726
    %728 = vmatmul.f32.gmra.mxu0 %v672
    %v729 = vpop.f32.mrf.mxu0
    %v730 = vadd.f32 0.0, %v729
    %731 = vmatmul.f32.gmra.mxu0 %v673
    %v732 = vpop.f32.mrf.mxu0
    %v733 = vadd.f32 0.0, %v732
    %734 = vmatmul.f32.gmra.mxu0 %v674
    %v735 = vpop.f32.mrf.mxu0
    %v736 = vadd.f32 0.0, %v735
    %737 = vmatmul.f32.gmra.mxu0 %v675
    %v738 = vpop.f32.mrf.mxu0
    %v739 = vadd.f32 0.0, %v738
    %740 = vmatmul.f32.gmra.mxu0 %v676
    %v741 = vpop.f32.mrf.mxu0
    %v742 = vadd.f32 0.0, %v741
    %743 = vmatmul.f32.gmra.mxu0 %v677
    %v744 = vpop.f32.mrf.mxu0
    %v745 = vadd.f32 0.0, %v744
    %746 = vmatmul.f32.gmra.mxu0 %v678
    %v747 = vpop.f32.mrf.mxu0
    %v748 = vadd.f32 0.0, %v747
    %749 = vmatmul.f32.gmra.mxu0 %v679
    %v750 = vpop.f32.mrf.mxu0
    %v751 = vadd.f32 0.0, %v750
    %752 = vmatmul.f32.gmra.mxu0 %v680
    %v753 = vpop.f32.mrf.mxu0
    %v754 = vadd.f32 0.0, %v753
    %755 = vmatmul.f32.gmra.mxu0 %v681
    %v756 = vpop.f32.mrf.mxu0
    %v757 = vadd.f32 0.0, %v756
    %758 = vmatmul.f32.gmra.mxu0 %v682
    %v759 = vpop.f32.mrf.mxu0
    %v760 = vadd.f32 0.0, %v759
    %761 = vmatmul.f32.gmra.mxu0 %v683
    %v762 = vpop.f32.mrf.mxu0
    %v763 = vadd.f32 0.0, %v762
    %764 = vdwg.mxu0
    %v765 = vmul.f32 %v718, %v228
    %v766 = vmul.f32 %v721, %v233
    %v767 = vmul.f32 %v724, %v238
    %v768 = vmul.f32 %v727, %v243
    %v769 = vmul.f32 %v730, %v248
    %v770 = vmul.f32 %v733, %v253
    %v771 = vmul.f32 %v736, %v258
    %v772 = vmul.f32 %v739, %v263
    %v773 = vmul.f32 %v742, %v268
    %v774 = vmul.f32 %v745, %v273
    %v775 = vmul.f32 %v748, %v278
    %v776 = vmul.f32 %v751, %v283
    %v777 = vmul.f32 %v754, %v288
    %v778 = vmul.f32 %v757, %v293
    %v779 = vmul.f32 %v760, %v298
    %v780 = vmul.f32 %v763, %v303
    %v781 = vpack.c.bf16 %v766, %v765
    %v782 = vpack.c.bf16 %v768, %v767
    %v783 = vpack.c.bf16 %v770, %v769
    %v784 = vpack.c.bf16 %v772, %v771
    %v785 = vpack.c.bf16 %v774, %v773
    %v786 = vpack.c.bf16 %v776, %v775
    %v787 = vpack.c.bf16 %v778, %v777
    %v788 = vpack.c.bf16 %v780, %v779
    %789 = vmatpush.bf16.msra.mxu0 %v788
    %790 = vmatpush.bf16.msra.mxu0 %v787
    %791 = vmatpush.bf16.msra.mxu0 %v786
    %792 = vmatpush.bf16.msra.mxu0 %v785
    %793 = vmatpush.bf16.msra.mxu0 %v784
    %794 = vmatpush.bf16.msra.mxu0 %v783
    %795 = vmatpush.bf16.msra.mxu0 %v782
    %796 = vmatpush.bf16.msra.mxu0 %v781
    %797 = vmatmul.bf16.gmra.mxu0 %v361
    %v798 = vpop.f32.mrf.mxu0
    %v799 = vadd.f32 0.0, %v798
    %v800 = vpop.f32.mrf.mxu0
    %v801 = vadd.f32 0.0, %v800
    %802 = vmatmul.bf16.gmra.mxu0 %v362
    %v803 = vpop.f32.mrf.mxu0
    %v804 = vadd.f32 0.0, %v803
    %v805 = vpop.f32.mrf.mxu0
    %v806 = vadd.f32 0.0, %v805
    %807 = vmatmul.bf16.gmra.mxu0 %v363
    %v808 = vpop.f32.mrf.mxu0
    %v809 = vadd.f32 0.0, %v808
    %v810 = vpop.f32.mrf.mxu0
    %v811 = vadd.f32 0.0, %v810
    %812 = vmatmul.bf16.gmra.mxu0 %v364
    %v813 = vpop.f32.mrf.mxu0
    %v814 = vadd.f32 0.0, %v813
    %v815 = vpop.f32.mrf.mxu0
    %v816 = vadd.f32 0.0, %v815
    %817 = vmatmul.bf16.gmra.mxu0 %v365
    %v818 = vpop.f32.mrf.mxu0
    %v819 = vadd.f32 0.0, %v818
    %v820 = vpop.f32.mrf.mxu0
    %v821 = vadd.f32 0.0, %v820
    %822 = vmatmul.bf16.gmra.mxu0 %v366
    %v823 = vpop.f32.mrf.mxu0
    %v824 = vadd.f32 0.0, %v823
    %v825 = vpop.f32.mrf.mxu0
    %v826 = vadd.f32 0.0, %v825
    %827 = vmatmul.bf16.gmra.mxu0 %v367
    %v828 = vpop.f32.mrf.mxu0
    %v829 = vadd.f32 0.0, %v828
    %v830 = vpop.f32.mrf.mxu0
    %v831 = vadd.f32 0.0, %v830
    %832 = vmatmul.bf16.gmra.mxu0 %v368
    %v833 = vpop.f32.mrf.mxu0
    %v834 = vadd.f32 0.0, %v833
    %v835 = vpop.f32.mrf.mxu0
    %v836 = vadd.f32 0.0, %v835
    %837 = vdwg.mxu0
    %v838 = vmul.f32 %v799, %v228
    %v839 = vmul.f32 %v801, %v233
    %v840 = vmul.f32 %v804, %v238
    %v841 = vmul.f32 %v806, %v243
    %v842 = vmul.f32 %v809, %v248
    %v843 = vmul.f32 %v811, %v253
    %v844 = vmul.f32 %v814, %v258
    %v845 = vmul.f32 %v816, %v263
    %v846 = vmul.f32 %v819, %v268
    %v847 = vmul.f32 %v821, %v273
    %v848 = vmul.f32 %v824, %v278
    %v849 = vmul.f32 %v826, %v283
    %v850 = vmul.f32 %v829, %v288
    %v851 = vmul.f32 %v831, %v293
    %v852 = vmul.f32 %v834, %v298
    %v853 = vmul.f32 %v836, %v303
    %v854 = vld [vmem:[%s8] sm:$0x1]
    %v856 = vperm.slane %v854, 0
    %v858 = vadd.f32 %v838, %v856
    %v859 = vadd.f32 %v839, %v856
    %v860 = vadd.f32 %v840, %v856
    %v861 = vadd.f32 %v841, %v856
    %v862 = vadd.f32 %v842, %v856
    %v863 = vadd.f32 %v843, %v856
    %v864 = vadd.f32 %v844, %v856
    %v865 = vadd.f32 %v845, %v856
    %v866 = vadd.f32 %v846, %v856
    %v867 = vadd.f32 %v847, %v856
    %v868 = vadd.f32 %v848, %v856
    %v869 = vadd.f32 %v849, %v856
    %v870 = vadd.f32 %v850, %v856
    %v871 = vadd.f32 %v851, %v856
    %v872 = vadd.f32 %v852, %v856
    %v873 = vadd.f32 %v853, %v856
    %874 = vst [vmem:[#allocation10] sm:$0xff] %v858
    %875 = vst [vmem:[#allocation10 + $0x8] sm:$0xff] %v859
    %876 = vst [vmem:[#allocation10 + $0x10] sm:$0xff] %v860
    %877 = vst [vmem:[#allocation10 + $0x18] sm:$0xff] %v861
    %878 = vst [vmem:[#allocation10 + $0x20] sm:$0xff] %v862
    %879 = vst [vmem:[#allocation10 + $0x28] sm:$0xff] %v863
    %880 = vst [vmem:[#allocation10 + $0x30] sm:$0xff] %v864
    %881 = vst [vmem:[#allocation10 + $0x38] sm:$0xff] %v865
    %882 = vst [vmem:[#allocation10 + $0x40] sm:$0xff] %v866
    %883 = vst [vmem:[#allocation10 + $0x48] sm:$0xff] %v867
    %884 = vst [vmem:[#allocation10 + $0x50] sm:$0xff] %v868
    %885 = vst [vmem:[#allocation10 + $0x58] sm:$0xff] %v869
    %886 = vst [vmem:[#allocation10 + $0x60] sm:$0xff] %v870
    %887 = vst [vmem:[#allocation10 + $0x68] sm:$0xff] %v871
    %888 = vst [vmem:[#allocation10 + $0x70] sm:$0xff] %v872
    %889 = vst [vmem:[#allocation10 + $0x78] sm:$0xff] %v873
    // Predicated region
    $region54: #{tpu_custom_call.1} parent=1 // pred_check
      _
    $region55: #{tpu_custom_call.1} parent=1 // pred_check_branch
      %891 = sbr.rel (0) target = $region57
    $region56: #{tpu_custom_call.1} parent=1 // pred_region
      %893 = vsyncadd [#allocation4], 0
      %s894 = sshll.u32 [#allocation10], 4
      %s895 = int_to_ptr.vmem [resolvable:$true] %s894
      %s896 = sshll.u32 %s9, 4
      %s897 = int_to_ptr.hbm [resolvable:$true] %s896
      %902 = dma.vmem_to_hbm [thread:$0]  %s895, 2048, %s897, [#allocation4], 128, 128, 8
    $region57: #{tpu_custom_call.1} parent=1 // pred_fallthru
      _
    // Predicated region
    $region58: #{tpu_custom_call.1} parent=1 // pred_check
      _
    $region59: #{tpu_custom_call.1} parent=1 // pred_check_branch
      %904 = sbr.rel (0) target = $region61
    $region60: #{tpu_custom_call.1} parent=1 // pred_region
      %906 = dma.done [#allocation4], 2048
    $region61: #{tpu_custom_call.1} parent=1 // pred_fallthru
      _
    %907 = vsyncpa [#allocation3], 1
    %908 = vsyncpa [#allocation6], 1
    %909 = vsyncpa [#allocation9], 1
    %910 = vsyncpa [#allocation4], 1

</llo_original>
